<compile_context>
chip_gen: v6e
topology: v6e:2x2x1
jax: 0.10.0
libtpu: 0.0.40
codegen_flags: <defaults>
</compile_context>

<pallas_src>
import jax
import jax.numpy as jnp
from jax.experimental import pallas as pl
from jax.experimental.pallas import tpu as pltpu


# Padded feature sizes (sublane-aligned).
_F_IN = 8     # 6  -> 8
_F_HID = 24   # 21 -> 24
_F_OUT = 8    # 3  -> 8


def _round_up(n, m):
    return ((n + m - 1) // m) * m


def mlp_kernel(w1_ref, w2_ref, w3_ref, w4_ref, v_ref, x_ref, o_ref):
    """One batch tile: x_ref (8, TB) -> o_ref (8, TB), batch on the lane axis."""
    x = x_ref[...]                       # (8, TB)  f32
    w1 = w1_ref[...]                     # (24, 8)   Linear(6->21)  padded
    w2 = w2_ref[...]                     # (24, 24)  Linear(21->21) padded
    w3 = w3_ref[...]                     # (24, 24)  Linear(21->21) padded
    w4 = w4_ref[...]                     # (8, 24)   Linear(21->3)  padded
    v = v_ref[...]                       # (24, 8)   packed biases / PReLU alphas

    b1 = v[:, 0:1]
    a1 = v[:, 1:2]
    b2 = v[:, 2:3]
    a2 = v[:, 3:4]
    b3 = v[:, 4:5]
    a3 = v[:, 5:6]
    b4 = v[0:_F_OUT, 6:7]

    h = jnp.dot(w1, x, preferred_element_type=jnp.float32) + b1     # (24, TB)
    h = jnp.where(h > 0, h, a1 * h)                                  # PReLU

    h = jnp.dot(w2, h, preferred_element_type=jnp.float32) + b2     # (24, TB)
    h = jnp.where(h > 0, h, a2 * h)

    h = jnp.dot(w3, h, preferred_element_type=jnp.float32) + b3     # (24, TB)
    h = jnp.where(h > 0, h, a3 * h)

    h = jnp.dot(w4, h, preferred_element_type=jnp.float32) + b4     # (8, TB)

    o_ref[...] = jnp.exp(h).astype(o_ref.dtype)


def model_m_forward(x, packed_params, *, batch_tile=512):
    """x: (B, 6) float32 -> (B, 3) float32 (same semantics as Model_M)."""
    w1p, w2p, w3p, w4p, v_slab = packed_params
    x = x.astype(jnp.float32)
    B = x.shape[0]

    # Batch tile along the lane axis: multiple of 128, capped at `batch_tile`.
    tb = min(batch_tile, _round_up(max(B, 1), 128))
    b_pad = _round_up(B, tb)

    # Wrapper-side layout plumbing: transpose to (features, batch) and
    # zero-pad features 6 -> 8, batch B -> b_pad.
    x_t = jnp.zeros((_F_IN, b_pad), jnp.float32).at[:6, :B].set(x.T)

    grid = (b_pad // tb,)
    const = lambda i: (0, 0)   # parameters: fetched once, VMEM-resident

    out_pad = pl.pallas_call(
        mlp_kernel,
        out_shape=jax.ShapeDtypeStruct((_F_OUT, b_pad), jnp.float32),
        grid_spec=pltpu.PrefetchScalarGridSpec(
            num_scalar_prefetch=0,
            grid=grid,
            in_specs=[
                pl.BlockSpec((_F_HID, _F_IN), const),    # w1 padded
                pl.BlockSpec((_F_HID, _F_HID), const),   # w2 padded
                pl.BlockSpec((_F_HID, _F_HID), const),   # w3 padded
                pl.BlockSpec((_F_OUT, _F_HID), const),   # w4 padded
                pl.BlockSpec((_F_HID, 8), const),        # bias/alpha slab
                # Activations: blocked along batch (lane axis).
                pl.BlockSpec((_F_IN, tb), lambda i: (0, i)),
            ],
            out_specs=pl.BlockSpec((_F_OUT, tb), lambda i: (0, i)),
        ),
        compiler_params=pltpu.CompilerParams(
            dimension_semantics=("parallel",),
        ),
        cost_estimate=pl.CostEstimate(
            flops=2 * B * (6 * 21 + 21 * 21 + 21 * 21 + 21 * 3),
            transcendentals=3 * B,
            bytes_accessed=4 * (B * 6 + B * 3
                                + _F_HID * _F_IN + 2 * _F_HID * _F_HID
                                + _F_OUT * _F_HID + _F_HID * 8),
        ),
    )(w1p, w2p, w3p, w4p, v_slab, x_t)

    # Strip feature/batch padding and transpose back to (B, 3).
    return out_pad[:3, :B].T


# ----------------------------------------------------------------------------
# Parameter construction (PyTorch-style init) + packing/padding for the kernel.
# ----------------------------------------------------------------------------

def init_raw_params(key):
    """PyTorch default init.  Weights kept in PyTorch (out, in) layout."""
    def linear(key, fan_in, fan_out):
        kw, kb = jax.random.split(key)
        bound = 1.0 / jnp.sqrt(jnp.float32(fan_in))
        w = jax.random.uniform(kw, (fan_out, fan_in), jnp.float32, -bound, bound)
        b = jax.random.uniform(kb, (fan_out,), jnp.float32, -bound, bound)
        return w, b

    k1, k2, k3, k4 = jax.random.split(key, 4)
    w1, b1 = linear(k1, 6, 21)
    w2, b2 = linear(k2, 21, 21)
    w3, b3 = linear(k3, 21, 21)
    w4, b4 = linear(k4, 21, 3)
    # PReLU default: alpha = 0.25 per channel.
    a1 = jnp.full((21,), 0.25, jnp.float32)
    a2 = jnp.full((21,), 0.25, jnp.float32)
    a3 = jnp.full((21,), 0.25, jnp.float32)
    return (w1, b1, a1, w2, b2, a2, w3, b3, a3, w4, b4)


def pack_params(raw):
    """Zero-pad the weights to aligned shapes; pack biases/alphas into one slab."""
    (w1, b1, a1, w2, b2, a2, w3, b3, a3, w4, b4) = raw

    w1p = jnp.zeros((_F_HID, _F_IN), jnp.float32).at[:21, :6].set(w1)
    w2p = jnp.zeros((_F_HID, _F_HID), jnp.float32).at[:21, :21].set(w2)
    w3p = jnp.zeros((_F_HID, _F_HID), jnp.float32).at[:21, :21].set(w3)
    w4p = jnp.zeros((_F_OUT, _F_HID), jnp.float32).at[:3, :21].set(w4)

    v_slab = jnp.zeros((_F_HID, 8), jnp.float32)
    v_slab = v_slab.at[:21, 0].set(b1)
    v_slab = v_slab.at[:21, 1].set(a1)
    v_slab = v_slab.at[:21, 2].set(b2)
    v_slab = v_slab.at[:21, 3].set(a2)
    v_slab = v_slab.at[:21, 4].set(b3)
    v_slab = v_slab.at[:21, 5].set(a3)
    v_slab = v_slab.at[:3, 6].set(b4)
    return (w1p, w2p, w3p, w4p, v_slab)


def reference_forward(x, raw):
    """Pure-JAX reference of the same forward pass (PyTorch semantics)."""
    (w1, b1, a1, w2, b2, a2, w3, b3, a3, w4, b4) = raw
    h = x @ w1.T + b1
    h = jnp.where(h > 0, h, a1 * h)
    h = h @ w2.T + b2
    h = jnp.where(h > 0, h, a2 * h)
    h = h @ w3.T + b3
    h = jnp.where(h > 0, h, a3 * h)
    h = h @ w4.T + b4
    return jnp.exp(h)


if __name__ == "__main__":
    key = jax.random.PRNGKey(0)
    k_x, k_x2, k_p = jax.random.split(key, 3)

    raw = init_raw_params(k_p)
    params = pack_params(raw)

    # Small batch (single grid step).
    B = 8
    x = jax.random.normal(k_x, (B, 6), jnp.float32)
    out = jax.block_until_ready(model_m_forward(x, params))
    ref = reference_forward(x, raw)
    assert out.shape == (B, 3)
    assert jnp.allclose(out, ref, rtol=1e-4, atol=1e-4), "mismatch vs reference (B=8)"

    # Larger, non-multiple batch to exercise the multi-tile grid + padding path.
    B2 = 700
    x2 = jax.random.normal(k_x2, (B2, 6), jnp.float32)
    out2 = jax.block_until_ready(model_m_forward(x2, params))
    ref2 = reference_forward(x2, raw)
    assert out2.shape == (B2, 3)
    assert jnp.allclose(out2, ref2, rtol=1e-4, atol=1e-4), "mismatch vs reference (B=700)"

    print("KERNEL_OK")
</pallas_src>

<mosaic_0001>
module attributes {stable_mosaic.version = 11 : i64} {
  func.func @mlp_kernel(%arg0: i32, %arg1: memref<24x8xf32, #tpu.memory_space<vmem>>, %arg2: memref<24x24xf32, #tpu.memory_space<vmem>>, %arg3: memref<24x24xf32, #tpu.memory_space<vmem>>, %arg4: memref<8x24xf32, #tpu.memory_space<vmem>>, %arg5: memref<24x8xf32, #tpu.memory_space<vmem>>, %arg6: memref<8x128xf32, #tpu.memory_space<vmem>>, %arg7: memref<8x128xf32, #tpu.memory_space<vmem>>) attributes {dimension_semantics = [#tpu.dimension_semantics<parallel>], iteration_bounds = array<i64: 1>, scalar_prefetch = 0 : i64, scratch_operands = 0 : i64, tpu.core_type = #tpu.core_type<tc>, window_params = [{pipeline_mode = #tpu.pipeline_mode<synchronous>, transform_indices = @transform_0, window_bounds = array<i64: 24, 8>}, {pipeline_mode = #tpu.pipeline_mode<synchronous>, transform_indices = @transform_1, window_bounds = array<i64: 24, 24>}, {pipeline_mode = #tpu.pipeline_mode<synchronous>, transform_indices = @transform_2, window_bounds = array<i64: 24, 24>}, {pipeline_mode = #tpu.pipeline_mode<synchronous>, transform_indices = @transform_3, window_bounds = array<i64: 8, 24>}, {pipeline_mode = #tpu.pipeline_mode<synchronous>, transform_indices = @transform_4, window_bounds = array<i64: 24, 8>}, {transform_indices = @transform_5, window_bounds = array<i64: 8, 128>}, {transform_indices = @transform_6, window_bounds = array<i64: 8, 128>}]} {
    %c0 = arith.constant 0 : index
    %c0_0 = arith.constant 0 : index
    %0 = vector.load %arg6[%c0, %c0_0] : memref<8x128xf32, #tpu.memory_space<vmem>>, vector<8x128xf32>
    %c0_1 = arith.constant 0 : index
    %c0_2 = arith.constant 0 : index
    %1 = vector.load %arg1[%c0_1, %c0_2] : memref<24x8xf32, #tpu.memory_space<vmem>>, vector<24x8xf32>
    %c0_3 = arith.constant 0 : index
    %c0_4 = arith.constant 0 : index
    %2 = vector.load %arg2[%c0_3, %c0_4] : memref<24x24xf32, #tpu.memory_space<vmem>>, vector<24x24xf32>
    %c0_5 = arith.constant 0 : index
    %c0_6 = arith.constant 0 : index
    %3 = vector.load %arg3[%c0_5, %c0_6] : memref<24x24xf32, #tpu.memory_space<vmem>>, vector<24x24xf32>
    %c0_7 = arith.constant 0 : index
    %c0_8 = arith.constant 0 : index
    %4 = vector.load %arg4[%c0_7, %c0_8] : memref<8x24xf32, #tpu.memory_space<vmem>>, vector<8x24xf32>
    %c0_9 = arith.constant 0 : index
    %c0_10 = arith.constant 0 : index
    %5 = vector.load %arg5[%c0_9, %c0_10] : memref<24x8xf32, #tpu.memory_space<vmem>>, vector<24x8xf32>
    %6 = vector.extract_strided_slice %5 {offsets = [0, 0], sizes = [24, 1], strides = [1, 1]} : vector<24x8xf32> to vector<24x1xf32>
    %7 = vector.extract_strided_slice %5 {offsets = [0, 1], sizes = [24, 1], strides = [1, 1]} : vector<24x8xf32> to vector<24x1xf32>
    %8 = vector.extract_strided_slice %5 {offsets = [0, 2], sizes = [24, 1], strides = [1, 1]} : vector<24x8xf32> to vector<24x1xf32>
    %9 = vector.extract_strided_slice %5 {offsets = [0, 3], sizes = [24, 1], strides = [1, 1]} : vector<24x8xf32> to vector<24x1xf32>
    %10 = vector.extract_strided_slice %5 {offsets = [0, 4], sizes = [24, 1], strides = [1, 1]} : vector<24x8xf32> to vector<24x1xf32>
    %11 = vector.extract_strided_slice %5 {offsets = [0, 5], sizes = [24, 1], strides = [1, 1]} : vector<24x8xf32> to vector<24x1xf32>
    %12 = vector.extract_strided_slice %5 {offsets = [0, 6], sizes = [8, 1], strides = [1, 1]} : vector<24x8xf32> to vector<8x1xf32>
    %cst = arith.constant dense<0.000000e+00> : vector<24x128xf32>
    %13 = tpu.matmul %1, %0, %cst {dimension_numbers = #tpu.dot_dimension_numbers<[1], [0], [0], [1], [0, 0, 1, 1], [], []>} : vector<24x8xf32>, vector<8x128xf32>, vector<24x128xf32> -> vector<24x128xf32>
    %14 = vector.broadcast %6 : vector<24x1xf32> to vector<24x128xf32>
    %15 = arith.addf %13, %14 : vector<24x128xf32>
    %cst_11 = arith.constant 0.000000e+00 : f32
    %16 = vector.broadcast %cst_11 : f32 to vector<24x128xf32>
    %17 = arith.cmpf ogt, %15, %16 : vector<24x128xf32>
    %18 = vector.broadcast %7 : vector<24x1xf32> to vector<24x128xf32>
    %19 = arith.mulf %18, %15 : vector<24x128xf32>
    %20 = arith.select %17, %15, %19 : vector<24x128xi1>, vector<24x128xf32>
    %cst_12 = arith.constant dense<0.000000e+00> : vector<24x128xf32>
    %21 = tpu.matmul %2, %20, %cst_12 {dimension_numbers = #tpu.dot_dimension_numbers<[1], [0], [0], [1], [0, 0, 1, 1], [], []>} : vector<24x24xf32>, vector<24x128xf32>, vector<24x128xf32> -> vector<24x128xf32>
    %22 = vector.broadcast %8 : vector<24x1xf32> to vector<24x128xf32>
    %23 = arith.addf %21, %22 : vector<24x128xf32>
    %cst_13 = arith.constant 0.000000e+00 : f32
    %24 = vector.broadcast %cst_13 : f32 to vector<24x128xf32>
    %25 = arith.cmpf ogt, %23, %24 : vector<24x128xf32>
    %26 = vector.broadcast %9 : vector<24x1xf32> to vector<24x128xf32>
    %27 = arith.mulf %26, %23 : vector<24x128xf32>
    %28 = arith.select %25, %23, %27 : vector<24x128xi1>, vector<24x128xf32>
    %cst_14 = arith.constant dense<0.000000e+00> : vector<24x128xf32>
    %29 = tpu.matmul %3, %28, %cst_14 {dimension_numbers = #tpu.dot_dimension_numbers<[1], [0], [0], [1], [0, 0, 1, 1], [], []>} : vector<24x24xf32>, vector<24x128xf32>, vector<24x128xf32> -> vector<24x128xf32>
    %30 = vector.broadcast %10 : vector<24x1xf32> to vector<24x128xf32>
    %31 = arith.addf %29, %30 : vector<24x128xf32>
    %cst_15 = arith.constant 0.000000e+00 : f32
    %32 = vector.broadcast %cst_15 : f32 to vector<24x128xf32>
    %33 = arith.cmpf ogt, %31, %32 : vector<24x128xf32>
    %34 = vector.broadcast %11 : vector<24x1xf32> to vector<24x128xf32>
    %35 = arith.mulf %34, %31 : vector<24x128xf32>
    %36 = arith.select %33, %31, %35 : vector<24x128xi1>, vector<24x128xf32>
    %cst_16 = arith.constant dense<0.000000e+00> : vector<8x128xf32>
    %37 = tpu.matmul %4, %36, %cst_16 {dimension_numbers = #tpu.dot_dimension_numbers<[1], [0], [0], [1], [0, 0, 1, 1], [], []>} : vector<8x24xf32>, vector<24x128xf32>, vector<8x128xf32> -> vector<8x128xf32>
    %38 = vector.broadcast %12 : vector<8x1xf32> to vector<8x128xf32>
    %39 = arith.addf %37, %38 : vector<8x128xf32>
    %40 = math.exp %39 : vector<8x128xf32>
    %c0_17 = arith.constant 0 : index
    %c0_18 = arith.constant 0 : index
    %41 = vector.load %arg7[%c0_17, %c0_18] : memref<8x128xf32, #tpu.memory_space<vmem>>, vector<8x128xf32>
    tpu.vector_store %arg7[%c0_17, %c0_18], %40 {strides = array<i32>} : memref<8x128xf32, #tpu.memory_space<vmem>>, vector<8x128xf32>,
    return
  }
  func.func @transform_0(%arg0: i32) -> (i32, i32) {
    %c0_i32 = arith.constant 0 : i32
    %c0_i32_0 = arith.constant 0 : i32
    %c0_i32_1 = arith.constant 0 : i32
    return %c0_i32, %c0_i32_0 : i32, i32
  }
  func.func @transform_1(%arg0: i32) -> (i32, i32) {
    %c0_i32 = arith.constant 0 : i32
    %c0_i32_0 = arith.constant 0 : i32
    %c0_i32_1 = arith.constant 0 : i32
    return %c0_i32, %c0_i32_0 : i32, i32
  }
  func.func @transform_2(%arg0: i32) -> (i32, i32) {
    %c0_i32 = arith.constant 0 : i32
    %c0_i32_0 = arith.constant 0 : i32
    %c0_i32_1 = arith.constant 0 : i32
    return %c0_i32, %c0_i32_0 : i32, i32
  }
  func.func @transform_3(%arg0: i32) -> (i32, i32) {
    %c0_i32 = arith.constant 0 : i32
    %c0_i32_0 = arith.constant 0 : i32
    %c0_i32_1 = arith.constant 0 : i32
    return %c0_i32, %c0_i32_0 : i32, i32
  }
  func.func @transform_4(%arg0: i32) -> (i32, i32) {
    %c0_i32 = arith.constant 0 : i32
    %c0_i32_0 = arith.constant 0 : i32
    %c0_i32_1 = arith.constant 0 : i32
    return %c0_i32, %c0_i32_0 : i32, i32
  }
  func.func @transform_5(%arg0: i32) -> (i32, i32) {
    %c0_i32 = arith.constant 0 : i32
    %c0_i32_0 = arith.constant 0 : i32
    return %c0_i32, %arg0 : i32, i32
  }
  func.func @transform_6(%arg0: i32) -> (i32, i32) {
    %c0_i32 = arith.constant 0 : i32
    %c0_i32_0 = arith.constant 0 : i32
    return %c0_i32, %arg0 : i32, i32
  }
}

</mosaic_0001>

<llo_original>
// kernel: tpu_custom_call.1
$region0: #{tpu_custom_call.1}
  #allocation0 [shape = 'u32[]', space=smem, size = 0x4, offset = 0x4, fixed_abs, tag = 'smem constant byte address 0x4 - core index']
  #allocation1 [shape = 'u32[144,128]{1,0:T(1,128)}', space=vmem, size = 0x12000, scoped, tag = 'internal scratch']
  %s0 = inlined_call_operand.vmem [shape: f32[24,8], index: 0, kind: input, shape index: {}]
  %s1 = inlined_call_operand.vmem [shape: f32[24,24], index: 1, kind: input, shape index: {}]
  %s2 = inlined_call_operand.vmem [shape: f32[24,24], index: 2, kind: input, shape index: {}]
  %s3 = inlined_call_operand.vmem [shape: f32[8,24], index: 3, kind: input, shape index: {}]
  %s4 = inlined_call_operand.vmem [shape: f32[24,8], index: 4, kind: input, shape index: {}]
  %s5 = inlined_call_operand.vmem [shape: f32[8,128], index: 5, kind: input, shape index: {}]
  %s6 = inlined_call_operand.hbm [shape: f32[8,128], index: 6, kind: output, shape index: {}]
  %s7 = sld [smem:[#allocation0]]
  $region34: #{tpu_custom_call.1} parent=0
    _
  %s9 = ssub.s32 1, %s7
  %s10 = scalar_select 0, %s9, %s7
  $region1: #{tpu_custom_call.1} parent=0
    #allocation2 [shape = 'u8[4096]{0}', space=vmem, size = 0x1000, scoped, tag = 'output window, operand 0, single buffered']
    #allocation3 [shape = 's32[1]{0}', space=sflag, size = 0x4, scoped, tag = 'scoped memory for tpu_custom_call.1']
    %11 = vsyncpa [#allocation3], 0
    // Predicated region
    $region2: #{tpu_custom_call.1} parent=1 // pred_check
      _
    $region3: #{tpu_custom_call.1} parent=1 // pred_check_branch
      %13 = sbr.rel (0) target = $region5
    $region4: #{tpu_custom_call.1} parent=1 // pred_region
      _
    $region5: #{tpu_custom_call.1} parent=1 // pred_fallthru
      _
    // Predicated region
    $region6: #{tpu_custom_call.1} parent=1 // pred_check
      _
    $region7: #{tpu_custom_call.1} parent=1 // pred_check_branch
      %15 = sbr.rel (0) target = $region9
    $region8: #{tpu_custom_call.1} parent=1 // pred_region
      _
    $region9: #{tpu_custom_call.1} parent=1 // pred_fallthru
      _
    // Predicated region
    $region10: #{tpu_custom_call.1} parent=1 // pred_check
      _
    $region11: #{tpu_custom_call.1} parent=1 // pred_check_branch
      %17 = sbr.rel (0) target = $region13
    $region12: #{tpu_custom_call.1} parent=1 // pred_region
      _
    $region13: #{tpu_custom_call.1} parent=1 // pred_fallthru
      _
    // Predicated region
    $region14: #{tpu_custom_call.1} parent=1 // pred_check
      _
    $region15: #{tpu_custom_call.1} parent=1 // pred_check_branch
      %19 = sbr.rel (0) target = $region17
    $region16: #{tpu_custom_call.1} parent=1 // pred_region
      _
    $region17: #{tpu_custom_call.1} parent=1 // pred_fallthru
      _
    // Predicated region
    $region18: #{tpu_custom_call.1} parent=1 // pred_check
      _
    $region19: #{tpu_custom_call.1} parent=1 // pred_check_branch
      %21 = sbr.rel (0) target = $region21
    $region20: #{tpu_custom_call.1} parent=1 // pred_region
      _
    $region21: #{tpu_custom_call.1} parent=1 // pred_fallthru
      _
    // Predicated region
    $region22: #{tpu_custom_call.1} parent=1 // pred_check
      _
    $region23: #{tpu_custom_call.1} parent=1 // pred_check_branch
      %23 = sbr.rel (0) target = $region25
    $region24: #{tpu_custom_call.1} parent=1 // pred_region
      _
    $region25: #{tpu_custom_call.1} parent=1 // pred_fallthru
      _
    %v24 = vld [vmem:[%s5] sm:$0xff]
    %v25 = vld [vmem:[%s0] sm:$0xff]
    %v26 = vld [vmem:[%s0 + $0x8] sm:$0xff]
    %v27 = vld [vmem:[%s0 + $0x10] sm:$0xff]
    %v28 = vld [vmem:[%s1] sm:$0xff]
    %v29 = vld [vmem:[%s1 + $0x8] sm:$0xff]
    %v30 = vld [vmem:[%s1 + $0x10] sm:$0xff]
    %v31 = vld [vmem:[%s2] sm:$0xff]
    %v32 = vld [vmem:[%s2 + $0x8] sm:$0xff]
    %v33 = vld [vmem:[%s2 + $0x10] sm:$0xff]
    %v34 = vld [vmem:[%s3] sm:$0xff]
    %v35 = vld [vmem:[%s4] sm:$0xff]
    %v36 = vld [vmem:[%s4 + $0x8] sm:$0xff]
    %v37 = vld [vmem:[%s4 + $0x10] sm:$0xff]
    %39 = vset.pattern.permute.xlu0 0
    %40 = vperm.xlu0 %39, %v35
    %v41 = vpop.permute.xlu0 %40
    %44 = vset.pattern.permute.xlu0 0
    %45 = vperm.xlu0 %44, %v36
    %v46 = vpop.permute.xlu0 %45
    %49 = vset.pattern.permute.xlu0 0
    %50 = vperm.xlu0 %49, %v37
    %v51 = vpop.permute.xlu0 %50
    %vm53 = vcmask 64512
    %v55 = vsel %vm53, %v25, 0
    %v58 = vsel %vm53, %v26, 0
    %v61 = vsel %vm53, %v27, 0
    %63 = vmatprep.subr.mxu0 0.0
    %64 = vmatpush1.msra.mxu0 0.0
    %65 = vmatprep.subr.mxu0 0.0
    %66 = vmatpush1.msra.mxu0 0.0
    %67 = vmatprep.subr.mxu0 0.0
    %68 = vmatpush1.msra.mxu0 0.0
    %69 = vmatprep.subr.mxu0 0.0
    %70 = vmatpush1.msra.mxu0 0.0
    %71 = vmatprep.subr.mxu0 0.0
    %72 = vmatpush1.msra.mxu0 0.0
    %73 = vmatprep.subr.mxu0 0.0
    %74 = vmatpush1.msra.mxu0 0.0
    %75 = vmatprep.subr.mxu0 0.0
    %76 = vmatpush1.msra.mxu0 0.0
    %77 = vmatprep.subr.mxu0 0.0
    %78 = vmatpush1.msra.mxu0 0.0
    %79 = vmatprep.subr.mxu0 0.0
    %80 = vmatpush1.msra.mxu0 0.0
    %81 = vmatprep.subr.mxu0 0.0
    %82 = vmatpush1.msra.mxu0 0.0
    %83 = vmatprep.subr.mxu0 0.0
    %84 = vmatpush1.msra.mxu0 0.0
    %85 = vmatprep.subr.mxu0 0.0
    %86 = vmatpush1.msra.mxu0 0.0
    %87 = vmatprep.subr.mxu0 0.0
    %88 = vmatpush1.msra.mxu0 0.0
    %89 = vmatprep.subr.mxu0 0.0
    %90 = vmatpush1.msra.mxu0 0.0
    %91 = vmatprep.subr.mxu0 0.0
    %92 = vmatpush1.msra.mxu0 0.0
    %93 = vmatprep.subr.mxu0 0.0
    %94 = vmatpush1.msra.mxu0 %v24
    %95 = vmatprep.subr.mxu0 0.0
    %96 = vmatpush2.msra.mxu0 0.0
    %97 = vmatprep.subr.mxu0 0.0
    %98 = vmatpush2.msra.mxu0 0.0
    %99 = vmatprep.subr.mxu0 0.0
    %100 = vmatpush2.msra.mxu0 0.0
    %101 = vmatprep.subr.mxu0 0.0
    %102 = vmatpush2.msra.mxu0 0.0
    %103 = vmatprep.subr.mxu0 0.0
    %104 = vmatpush2.msra.mxu0 0.0
    %105 = vmatprep.subr.mxu0 0.0
    %106 = vmatpush2.msra.mxu0 0.0
    %107 = vmatprep.subr.mxu0 0.0
    %108 = vmatpush2.msra.mxu0 0.0
    %109 = vmatprep.subr.mxu0 0.0
    %110 = vmatpush2.msra.mxu0 0.0
    %111 = vmatprep.subr.mxu0 0.0
    %112 = vmatpush2.msra.mxu0 0.0
    %113 = vmatprep.subr.mxu0 0.0
    %114 = vmatpush2.msra.mxu0 0.0
    %115 = vmatprep.subr.mxu0 0.0
    %116 = vmatpush2.msra.mxu0 0.0
    %117 = vmatprep.subr.mxu0 0.0
    %118 = vmatpush2.msra.mxu0 0.0
    %119 = vmatprep.subr.mxu0 0.0
    %120 = vmatpush2.msra.mxu0 0.0
    %121 = vmatprep.subr.mxu0 0.0
    %122 = vmatpush2.msra.mxu0 0.0
    %123 = vmatprep.subr.mxu0 0.0
    %124 = vmatpush2.msra.mxu0 0.0
    %125 = vmatprep.subr.mxu0 0.0
    %126 = vmatpush2.msra.mxu0 0.0
    %127 = vmatprep.mubr.f32.mxu0 0.0
    %128 = vmatmul.mubr.f32.gmra.mxu0 %v55
    %v129 = vpop.f32.mrf.mxu0
    %v130 = vadd.f32 %v41, %v129
    %v131 = vpop.f32.mrf.mxu0
    %132 = vmatprep.mubr.f32.mxu0 0.0
    %133 = vmatmul.mubr.f32.gmra.mxu0 %v58
    %v134 = vpop.f32.mrf.mxu0
    %v135 = vadd.f32 %v46, %v134
    %v136 = vpop.f32.mrf.mxu0
    %137 = vmatprep.mubr.f32.mxu0 0.0
    %138 = vmatmul.mubr.f32.gmra.mxu0 %v61
    %v139 = vpop.f32.mrf.mxu0
    %v140 = vadd.f32 %v51, %v139
    %v141 = vpop.f32.mrf.mxu0
    %142 = vdwg.mxu0
    %vm143 = vcmp.gt.f32.partialorder %v130, 0.0
    %vm144 = vcmp.gt.f32.partialorder %v135, 0.0
    %vm145 = vcmp.gt.f32.partialorder %v140, 0.0
    %146 = vset.pattern.permute.xlu0 1
    %147 = vperm.xlu0 %146, %v35
    %v148 = vpop.permute.xlu0 %147
    %150 = vset.pattern.permute.xlu0 1
    %151 = vperm.xlu0 %150, %v36
    %v152 = vpop.permute.xlu0 %151
    %154 = vset.pattern.permute.xlu0 1
    %155 = vperm.xlu0 %154, %v37
    %v156 = vpop.permute.xlu0 %155
    %v158 = vmul.f32 %v148, %v130
    %v159 = vmul.f32 %v152, %v135
    %v160 = vmul.f32 %v156, %v140
    %v161 = vsel %vm143, %v130, %v158
    %v162 = vsel %vm144, %v135, %v159
    %v163 = vsel %vm145, %v140, %v160
    %164 = vset.pattern.permute.xlu0 2
    %165 = vperm.xlu0 %164, %v35
    %v166 = vpop.permute.xlu0 %165
    %168 = vset.pattern.permute.xlu0 2
    %169 = vperm.xlu0 %168, %v36
    %v170 = vpop.permute.xlu0 %169
    %172 = vset.pattern.permute.xlu0 2
    %173 = vperm.xlu0 %172, %v37
    %v174 = vpop.permute.xlu0 %173
    %vm176 = vcmask 195584
    %v178 = vsel %vm176, %v28, 0
    %v181 = vsel %vm176, %v29, 0
    %v184 = vsel %vm176, %v30, 0
    %186 = vmatprep.subr.mxu0 0.0
    %187 = vmatpush1.msra.mxu0 0.0
    %188 = vmatprep.subr.mxu0 0.0
    %189 = vmatpush1.msra.mxu0 0.0
    %190 = vmatprep.subr.mxu0 0.0
    %191 = vmatpush1.msra.mxu0 0.0
    %192 = vmatprep.subr.mxu0 0.0
    %193 = vmatpush1.msra.mxu0 0.0
    %194 = vmatprep.subr.mxu0 0.0
    %195 = vmatpush1.msra.mxu0 0.0
    %196 = vmatprep.subr.mxu0 0.0
    %197 = vmatpush1.msra.mxu0 0.0
    %198 = vmatprep.subr.mxu0 0.0
    %199 = vmatpush1.msra.mxu0 0.0
    %200 = vmatprep.subr.mxu0 0.0
    %201 = vmatpush1.msra.mxu0 0.0
    %202 = vmatprep.subr.mxu0 0.0
    %203 = vmatpush1.msra.mxu0 0.0
    %204 = vmatprep.subr.mxu0 0.0
    %205 = vmatpush1.msra.mxu0 0.0
    %206 = vmatprep.subr.mxu0 0.0
    %207 = vmatpush1.msra.mxu0 0.0
    %208 = vmatprep.subr.mxu0 0.0
    %209 = vmatpush1.msra.mxu0 0.0
    %210 = vmatprep.subr.mxu0 0.0
    %211 = vmatpush1.msra.mxu0 0.0
    %212 = vmatprep.subr.mxu0 0.0
    %213 = vmatpush1.msra.mxu0 %v163
    %214 = vmatprep.subr.mxu0 0.0
    %215 = vmatpush1.msra.mxu0 %v162
    %216 = vmatprep.subr.mxu0 0.0
    %217 = vmatpush1.msra.mxu0 %v161
    %218 = vmatprep.subr.mxu0 0.0
    %219 = vmatpush2.msra.mxu0 0.0
    %220 = vmatprep.subr.mxu0 0.0
    %221 = vmatpush2.msra.mxu0 0.0
    %222 = vmatprep.subr.mxu0 0.0
    %223 = vmatpush2.msra.mxu0 0.0
    %224 = vmatprep.subr.mxu0 0.0
    %225 = vmatpush2.msra.mxu0 0.0
    %226 = vmatprep.subr.mxu0 0.0
    %227 = vmatpush2.msra.mxu0 0.0
    %228 = vmatprep.subr.mxu0 0.0
    %229 = vmatpush2.msra.mxu0 0.0
    %230 = vmatprep.subr.mxu0 0.0
    %231 = vmatpush2.msra.mxu0 0.0
    %232 = vmatprep.subr.mxu0 0.0
    %233 = vmatpush2.msra.mxu0 0.0
    %234 = vmatprep.subr.mxu0 0.0
    %235 = vmatpush2.msra.mxu0 0.0
    %236 = vmatprep.subr.mxu0 0.0
    %237 = vmatpush2.msra.mxu0 0.0
    %238 = vmatprep.subr.mxu0 0.0
    %239 = vmatpush2.msra.mxu0 0.0
    %240 = vmatprep.subr.mxu0 0.0
    %241 = vmatpush2.msra.mxu0 0.0
    %242 = vmatprep.subr.mxu0 0.0
    %243 = vmatpush2.msra.mxu0 0.0
    %244 = vmatprep.subr.mxu0 0.0
    %245 = vmatpush2.msra.mxu0 0.0
    %246 = vmatprep.subr.mxu0 0.0
    %247 = vmatpush2.msra.mxu0 0.0
    %248 = vmatprep.subr.mxu0 0.0
    %249 = vmatpush2.msra.mxu0 0.0
    %250 = vmatprep.mubr.f32.mxu0 0.0
    %251 = vmatmul.mubr.f32.gmra.mxu0 %v178
    %v252 = vpop.f32.mrf.mxu0
    %v253 = vadd.f32 %v166, %v252
    %v254 = vpop.f32.mrf.mxu0
    %255 = vmatprep.mubr.f32.mxu0 0.0
    %256 = vmatmul.mubr.f32.gmra.mxu0 %v181
    %v257 = vpop.f32.mrf.mxu0
    %v258 = vadd.f32 %v170, %v257
    %v259 = vpop.f32.mrf.mxu0
    %260 = vmatprep.mubr.f32.mxu0 0.0
    %261 = vmatmul.mubr.f32.gmra.mxu0 %v184
    %v262 = vpop.f32.mrf.mxu0
    %v263 = vadd.f32 %v174, %v262
    %v264 = vpop.f32.mrf.mxu0
    %265 = vdwg.mxu0
    %vm266 = vcmp.gt.f32.partialorder %v253, 0.0
    %vm267 = vcmp.gt.f32.partialorder %v258, 0.0
    %vm268 = vcmp.gt.f32.partialorder %v263, 0.0
    %269 = vset.pattern.permute.xlu0 3
    %270 = vperm.xlu0 %269, %v35
    %v271 = vpop.permute.xlu0 %270
    %273 = vset.pattern.permute.xlu0 3
    %274 = vperm.xlu0 %273, %v36
    %v275 = vpop.permute.xlu0 %274
    %277 = vset.pattern.permute.xlu0 3
    %278 = vperm.xlu0 %277, %v37
    %v279 = vpop.permute.xlu0 %278
    %v281 = vmul.f32 %v271, %v253
    %v282 = vmul.f32 %v275, %v258
    %v283 = vmul.f32 %v279, %v263
    %v284 = vsel %vm266, %v253, %v281
    %v285 = vsel %vm267, %v258, %v282
    %v286 = vsel %vm268, %v263, %v283
    %287 = vset.pattern.permute.xlu0 4
    %288 = vperm.xlu0 %287, %v35
    %v289 = vpop.permute.xlu0 %288
    %291 = vset.pattern.permute.xlu0 4
    %292 = vperm.xlu0 %291, %v36
    %v293 = vpop.permute.xlu0 %292
    %295 = vset.pattern.permute.xlu0 4
    %296 = vperm.xlu0 %295, %v37
    %v297 = vpop.permute.xlu0 %296
    %v300 = vsel %vm176, %v31, 0
    %v303 = vsel %vm176, %v32, 0
    %v306 = vsel %vm176, %v33, 0
    %308 = vmatprep.subr.mxu0 0.0
    %309 = vmatpush1.msra.mxu0 0.0
    %310 = vmatprep.subr.mxu0 0.0
    %311 = vmatpush1.msra.mxu0 0.0
    %312 = vmatprep.subr.mxu0 0.0
    %313 = vmatpush1.msra.mxu0 0.0
    %314 = vmatprep.subr.mxu0 0.0
    %315 = vmatpush1.msra.mxu0 0.0
    %316 = vmatprep.subr.mxu0 0.0
    %317 = vmatpush1.msra.mxu0 0.0
    %318 = vmatprep.subr.mxu0 0.0
    %319 = vmatpush1.msra.mxu0 0.0
    %320 = vmatprep.subr.mxu0 0.0
    %321 = vmatpush1.msra.mxu0 0.0
    %322 = vmatprep.subr.mxu0 0.0
    %323 = vmatpush1.msra.mxu0 0.0
    %324 = vmatprep.subr.mxu0 0.0
    %325 = vmatpush1.msra.mxu0 0.0
    %326 = vmatprep.subr.mxu0 0.0
    %327 = vmatpush1.msra.mxu0 0.0
    %328 = vmatprep.subr.mxu0 0.0
    %329 = vmatpush1.msra.mxu0 0.0
    %330 = vmatprep.subr.mxu0 0.0
    %331 = vmatpush1.msra.mxu0 0.0
    %332 = vmatprep.subr.mxu0 0.0
    %333 = vmatpush1.msra.mxu0 0.0
    %334 = vmatprep.subr.mxu0 0.0
    %335 = vmatpush1.msra.mxu0 %v286
    %336 = vmatprep.subr.mxu0 0.0
    %337 = vmatpush1.msra.mxu0 %v285
    %338 = vmatprep.subr.mxu0 0.0
    %339 = vmatpush1.msra.mxu0 %v284
    %340 = vmatprep.subr.mxu0 0.0
    %341 = vmatpush2.msra.mxu0 0.0
    %342 = vmatprep.subr.mxu0 0.0
    %343 = vmatpush2.msra.mxu0 0.0
    %344 = vmatprep.subr.mxu0 0.0
    %345 = vmatpush2.msra.mxu0 0.0
    %346 = vmatprep.subr.mxu0 0.0
    %347 = vmatpush2.msra.mxu0 0.0
    %348 = vmatprep.subr.mxu0 0.0
    %349 = vmatpush2.msra.mxu0 0.0
    %350 = vmatprep.subr.mxu0 0.0
    %351 = vmatpush2.msra.mxu0 0.0
    %352 = vmatprep.subr.mxu0 0.0
    %353 = vmatpush2.msra.mxu0 0.0
    %354 = vmatprep.subr.mxu0 0.0
    %355 = vmatpush2.msra.mxu0 0.0
    %356 = vmatprep.subr.mxu0 0.0
    %357 = vmatpush2.msra.mxu0 0.0
    %358 = vmatprep.subr.mxu0 0.0
    %359 = vmatpush2.msra.mxu0 0.0
    %360 = vmatprep.subr.mxu0 0.0
    %361 = vmatpush2.msra.mxu0 0.0
    %362 = vmatprep.subr.mxu0 0.0
    %363 = vmatpush2.msra.mxu0 0.0
    %364 = vmatprep.subr.mxu0 0.0
    %365 = vmatpush2.msra.mxu0 0.0
    %366 = vmatprep.subr.mxu0 0.0
    %367 = vmatpush2.msra.mxu0 0.0
    %368 = vmatprep.subr.mxu0 0.0
    %369 = vmatpush2.msra.mxu0 0.0
    %370 = vmatprep.subr.mxu0 0.0
    %371 = vmatpush2.msra.mxu0 0.0
    %372 = vmatprep.mubr.f32.mxu0 0.0
    %373 = vmatmul.mubr.f32.gmra.mxu0 %v300
    %v374 = vpop.f32.mrf.mxu0
    %v375 = vadd.f32 %v289, %v374
    %v376 = vpop.f32.mrf.mxu0
    %377 = vmatprep.mubr.f32.mxu0 0.0
    %378 = vmatmul.mubr.f32.gmra.mxu0 %v303
    %v379 = vpop.f32.mrf.mxu0
    %v380 = vadd.f32 %v293, %v379
    %v381 = vpop.f32.mrf.mxu0
    %382 = vmatprep.mubr.f32.mxu0 0.0
    %383 = vmatmul.mubr.f32.gmra.mxu0 %v306
    %v384 = vpop.f32.mrf.mxu0
    %v385 = vadd.f32 %v297, %v384
    %v386 = vpop.f32.mrf.mxu0
    %387 = vdwg.mxu0
    %vm388 = vcmp.gt.f32.partialorder %v375, 0.0
    %vm389 = vcmp.gt.f32.partialorder %v380, 0.0
    %vm390 = vcmp.gt.f32.partialorder %v385, 0.0
    %391 = vset.pattern.permute.xlu0 5
    %392 = vperm.xlu0 %391, %v35
    %v393 = vpop.permute.xlu0 %392
    %395 = vset.pattern.permute.xlu0 5
    %396 = vperm.xlu0 %395, %v36
    %v397 = vpop.permute.xlu0 %396
    %399 = vset.pattern.permute.xlu0 5
    %400 = vperm.xlu0 %399, %v37
    %v401 = vpop.permute.xlu0 %400
    %v403 = vmul.f32 %v393, %v375
    %v404 = vmul.f32 %v397, %v380
    %v405 = vmul.f32 %v401, %v385
    %v406 = vsel %vm388, %v375, %v403
    %v407 = vsel %vm389, %v380, %v404
    %v408 = vsel %vm390, %v385, %v405
    %409 = vset.pattern.permute.xlu0 6
    %410 = vperm.xlu0 %409, %v35
    %v411 = vpop.permute.xlu0 %410
    %v414 = vsel %vm176, %v34, 0
    %416 = vmatprep.subr.mxu0 0.0
    %417 = vmatpush1.msra.mxu0 0.0
    %418 = vmatprep.subr.mxu0 0.0
    %419 = vmatpush1.msra.mxu0 0.0
    %420 = vmatprep.subr.mxu0 0.0
    %421 = vmatpush1.msra.mxu0 0.0
    %422 = vmatprep.subr.mxu0 0.0
    %423 = vmatpush1.msra.mxu0 0.0
    %424 = vmatprep.subr.mxu0 0.0
    %425 = vmatpush1.msra.mxu0 0.0
    %426 = vmatprep.subr.mxu0 0.0
    %427 = vmatpush1.msra.mxu0 0.0
    %428 = vmatprep.subr.mxu0 0.0
    %429 = vmatpush1.msra.mxu0 0.0
    %430 = vmatprep.subr.mxu0 0.0
    %431 = vmatpush1.msra.mxu0 0.0
    %432 = vmatprep.subr.mxu0 0.0
    %433 = vmatpush1.msra.mxu0 0.0
    %434 = vmatprep.subr.mxu0 0.0
    %435 = vmatpush1.msra.mxu0 0.0
    %436 = vmatprep.subr.mxu0 0.0
    %437 = vmatpush1.msra.mxu0 0.0
    %438 = vmatprep.subr.mxu0 0.0
    %439 = vmatpush1.msra.mxu0 0.0
    %440 = vmatprep.subr.mxu0 0.0
    %441 = vmatpush1.msra.mxu0 0.0
    %442 = vmatprep.subr.mxu0 0.0
    %443 = vmatpush1.msra.mxu0 %v408
    %444 = vmatprep.subr.mxu0 0.0
    %445 = vmatpush1.msra.mxu0 %v407
    %446 = vmatprep.subr.mxu0 0.0
    %447 = vmatpush1.msra.mxu0 %v406
    %448 = vmatprep.subr.mxu0 0.0
    %449 = vmatpush2.msra.mxu0 0.0
    %450 = vmatprep.subr.mxu0 0.0
    %451 = vmatpush2.msra.mxu0 0.0
    %452 = vmatprep.subr.mxu0 0.0
    %453 = vmatpush2.msra.mxu0 0.0
    %454 = vmatprep.subr.mxu0 0.0
    %455 = vmatpush2.msra.mxu0 0.0
    %456 = vmatprep.subr.mxu0 0.0
    %457 = vmatpush2.msra.mxu0 0.0
    %458 = vmatprep.subr.mxu0 0.0
    %459 = vmatpush2.msra.mxu0 0.0
    %460 = vmatprep.subr.mxu0 0.0
    %461 = vmatpush2.msra.mxu0 0.0
    %462 = vmatprep.subr.mxu0 0.0
    %463 = vmatpush2.msra.mxu0 0.0
    %464 = vmatprep.subr.mxu0 0.0
    %465 = vmatpush2.msra.mxu0 0.0
    %466 = vmatprep.subr.mxu0 0.0
    %467 = vmatpush2.msra.mxu0 0.0
    %468 = vmatprep.subr.mxu0 0.0
    %469 = vmatpush2.msra.mxu0 0.0
    %470 = vmatprep.subr.mxu0 0.0
    %471 = vmatpush2.msra.mxu0 0.0
    %472 = vmatprep.subr.mxu0 0.0
    %473 = vmatpush2.msra.mxu0 0.0
    %474 = vmatprep.subr.mxu0 0.0
    %475 = vmatpush2.msra.mxu0 0.0
    %476 = vmatprep.subr.mxu0 0.0
    %477 = vmatpush2.msra.mxu0 0.0
    %478 = vmatprep.subr.mxu0 0.0
    %479 = vmatpush2.msra.mxu0 0.0
    %480 = vmatprep.mubr.f32.mxu0 0.0
    %481 = vmatmul.mubr.f32.gmra.mxu0 %v414
    %v482 = vpop.f32.mrf.mxu0
    %v483 = vadd.f32 %v411, %v482
    %v484 = vpop.f32.mrf.mxu0
    %485 = vdwg.mxu0
    %v486 = vmul.f32 %v483, 1.442695
    %v487 = vpow.pop %v486
    %488 = vst [vmem:[#allocation2] sm:$0xff] %v487
    // Predicated region
    $region26: #{tpu_custom_call.1} parent=1 // pred_check
      _
    $region27: #{tpu_custom_call.1} parent=1 // pred_check_branch
      %490 = sbr.rel (0) target = $region29
    $region28: #{tpu_custom_call.1} parent=1 // pred_region
      %s492 = ssub.s32 128, 128
      %493 = vsyncadd [#allocation3], %s492
      %s495 = sshll.u32 [#allocation2], 4
      %s496 = int_to_ptr.vmem [resolvable:$true] %s495
      %498 = dma.vmem_to_hbm [thread:$0]  %s496, 128, %s6, [#allocation3]
    $region29: #{tpu_custom_call.1} parent=1 // pred_fallthru
      _
    // Predicated region
    $region30: #{tpu_custom_call.1} parent=1 // pred_check
      _
    $region31: #{tpu_custom_call.1} parent=1 // pred_check_branch
      %500 = sbr.rel (0) target = $region33
    $region32: #{tpu_custom_call.1} parent=1 // pred_region
      %501 = dma.done [#allocation3], 128
    $region33: #{tpu_custom_call.1} parent=1 // pred_fallthru
      _
    %502 = vsyncpa [#allocation3], 1

</llo_original>
